<compile_context>
chip_gen: v5e
topology: v5e:2x2
jax: 0.10.0
libtpu: 0.0.40
codegen_flags: <defaults>
</compile_context>

<pallas_src>
import jax
import jax.numpy as jnp
from jax import lax
from jax.experimental import pallas as pl
from jax.experimental.pallas import tpu as pltpu  # noqa: F401  (TPU backend import parity)

B, S, D_IN, D_OUT = 1, 8, 8, 16   # shapes consistent with Linear(8, 16)


def qk_kernel(x_ref, wqkb_ref, out_ref):
    # x_ref:    (S, D_IN)          -- full problem (B == 1), no grid
    # wqkb_ref: (D_IN+1, 2*D_OUT)  -- rows [0:D_IN] = [Wq | Wk], row D_IN = [bq | bk]
    # out_ref:  (S, S)
    x = x_ref[...]
    wb = wqkb_ref[...]
    w = wb[:D_IN, :]            # static, sublane-aligned slice (offset 8) -> no copy
    b = wb[D_IN:, :]            # (1, 2*D_OUT) bias row, broadcasts over sublanes
    # Single fused projection matmul on the MXU, f32 accumulation; bias add is one
    # VPU op on a single vreg (free filler under the MXU).
    y = jnp.dot(x, w, preferred_element_type=jnp.float32) + b
    q = y[:, :D_OUT]
    k = y[:, D_OUT:]
    # q @ k^T expressed as a (1,1) contraction -> MXU consumes k directly,
    # no materialized transpose.
    # TODO(synk): per review, inspect pl.lower_as_mlir for an XLU lane-rotate on the
    # y[:, D_OUT:] slice; at 8x16 the XLU slot is idle so it is expected free filler.
    out_ref[...] = lax.dot_general(
        q, k,
        dimension_numbers=(((1,), (1,)), ((), ())),
        preferred_element_type=jnp.float32,
    )


def fuse_qk_params(wq, bq, wk, bk):
    """Build the fused [Wq|Wk ; bq|bk] operand ONCE at init time (not per forward)."""
    wqk = jnp.concatenate([wq, wk], axis=1)            # (D_IN, 2*D_OUT)
    bqk = jnp.concatenate([bq, bk], axis=1)            # (1, 2*D_OUT)
    return jnp.concatenate([wqk, bqk], axis=0)         # (D_IN+1, 2*D_OUT)


def model_forward(x, wqkb):
    assert x.shape == (B, S, D_IN) and B == 1
    # TODO(synk): if this op is called for many batches/heads, stack them along the
    # sublane (M) axis into one call (M ~ 128-256) and reintroduce a leading
    # "parallel" grid axis so v7x shards across its two TensorCores; with B == 1 a
    # gridless single-shot call is strictly cheaper.
    x2d = x.reshape(S, D_IN)                            # fold batch into sublane rows

    flops = 2 * S * D_IN * (2 * D_OUT) + 2 * S * D_OUT * S
    bytes_accessed = 4 * (S * D_IN + (D_IN + 1) * 2 * D_OUT + S * S)

    qk2d = pl.pallas_call(
        qk_kernel,
        out_shape=jax.ShapeDtypeStruct((S, S), jnp.float32),
        # Block last-dims < 128 are legal because they equal the full array dims.
        in_specs=[
            pl.BlockSpec((S, D_IN), lambda: (0, 0)),
            pl.BlockSpec((D_IN + 1, 2 * D_OUT), lambda: (0, 0)),
        ],
        out_specs=pl.BlockSpec((S, S), lambda: (0, 0)),
        cost_estimate=pl.CostEstimate(
            flops=flops, transcendentals=0, bytes_accessed=bytes_accessed),
    )(x2d, wqkb)
    return qk2d.reshape(B, S, S)


def init_params(key):
    # Deterministic init mimicking nn.Linear default: U(-1/sqrt(fan_in), 1/sqrt(fan_in))
    bound = 1.0 / jnp.sqrt(jnp.float32(D_IN))
    keys = jax.random.split(key, 6)
    mk_w = lambda k: jax.random.uniform(k, (D_IN, D_OUT), jnp.float32, -bound, bound)
    mk_b = lambda k: jax.random.uniform(k, (1, D_OUT), jnp.float32, -bound, bound)
    wk, bk = mk_w(keys[0]), mk_b(keys[1])
    wq, bq = mk_w(keys[2]), mk_b(keys[3])
    wv, bv = mk_w(keys[4]), mk_b(keys[5])   # value projection: dead code in the forward
    return wq, bq, wk, bk, wv, bv


if __name__ == "__main__":
    root = jax.random.PRNGKey(0)
    k_x, k_p = jax.random.split(root)
    x = jax.random.normal(k_x, (B, S, D_IN), jnp.float32)
    wq, bq, wk, bk, wv, bv = init_params(k_p)

    # Fuse once, outside the per-call path (review item #1 / #2).
    wqkb = jax.block_until_ready(fuse_qk_params(wq, bq, wk, bk))

    qk = model_forward(x, wqkb)
    qk = jax.block_until_ready(qk)

    # Pure-JAX reference (v = value(x) is unused in the PyTorch forward's output)
    q_ref = x @ wq + bq
    k_ref = x @ wk + bk
    ref = jnp.einsum("bsd,btd->bst", q_ref, k_ref)
    assert qk.shape == (B, S, S)
    assert jnp.allclose(qk, ref, atol=1e-5, rtol=1e-5)

    print("KERNEL_OK")
</pallas_src>

<mosaic_0001>
module attributes {stable_mosaic.version = 11 : i64} {
  func.func @qk_kernel(%arg0: memref<8x8xf32, #tpu.memory_space<vmem>>, %arg1: memref<9x32xf32, #tpu.memory_space<vmem>>, %arg2: memref<8x8xf32, #tpu.memory_space<vmem>>) attributes {dimension_semantics = [], scalar_prefetch = 0 : i64, scratch_operands = 0 : i64, tpu.core_type = #tpu.core_type<tc>} {
    %c0 = arith.constant 0 : index
    %c0_0 = arith.constant 0 : index
    %0 = vector.load %arg0[%c0, %c0_0] : memref<8x8xf32, #tpu.memory_space<vmem>>, vector<8x8xf32>
    %c0_1 = arith.constant 0 : index
    %c0_2 = arith.constant 0 : index
    %1 = vector.load %arg1[%c0_1, %c0_2] : memref<9x32xf32, #tpu.memory_space<vmem>>, vector<9x32xf32>
    %2 = vector.extract_strided_slice %1 {offsets = [0, 0], sizes = [8, 32], strides = [1, 1]} : vector<9x32xf32> to vector<8x32xf32>
    %3 = vector.extract_strided_slice %1 {offsets = [8, 0], sizes = [1, 32], strides = [1, 1]} : vector<9x32xf32> to vector<1x32xf32>
    %cst = arith.constant dense<0.000000e+00> : vector<8x32xf32>
    %4 = tpu.matmul %0, %2, %cst {dimension_numbers = #tpu.dot_dimension_numbers<[1], [0], [0], [1], [0, 0, 1, 1], [], []>} : vector<8x8xf32>, vector<8x32xf32>, vector<8x32xf32> -> vector<8x32xf32>
    %5 = vector.broadcast %3 : vector<1x32xf32> to vector<8x32xf32>
    %6 = arith.addf %4, %5 : vector<8x32xf32>
    %7 = vector.extract_strided_slice %6 {offsets = [0, 0], sizes = [8, 16], strides = [1, 1]} : vector<8x32xf32> to vector<8x16xf32>
    %8 = vector.extract_strided_slice %6 {offsets = [0, 16], sizes = [8, 16], strides = [1, 1]} : vector<8x32xf32> to vector<8x16xf32>
    %cst_3 = arith.constant dense<0.000000e+00> : vector<8x8xf32>
    %9 = tpu.matmul %7, %8, %cst_3 {dimension_numbers = #tpu.dot_dimension_numbers<[1], [1], [0], [0], [0, 0, 1, 0], [], []>} : vector<8x16xf32>, vector<8x16xf32>, vector<8x8xf32> -> vector<8x8xf32>
    %c0_4 = arith.constant 0 : index
    %c0_5 = arith.constant 0 : index
    %10 = vector.load %arg2[%c0_4, %c0_5] : memref<8x8xf32, #tpu.memory_space<vmem>>, vector<8x8xf32>
    tpu.vector_store %arg2[%c0_4, %c0_5], %9 {strides = array<i32>} : memref<8x8xf32, #tpu.memory_space<vmem>>, vector<8x8xf32>,
    return
  }
}

</mosaic_0001>

<llo_original>
// kernel: tpu_custom_call.1
$region0: #{tpu_custom_call.1}
  #allocation0 [shape = 'u32[]', space=smem, size = 0x4, offset = 0x4, fixed_abs, tag = 'smem constant byte address 0x4 - core index']
  #allocation1 [shape = 'u32[72,128]{1,0:T(1,128)}', space=vmem, size = 0x9000, scoped, tag = 'internal scratch']
  %s0 = inlined_call_operand.hbm [shape: f32[8,8], index: 0, kind: input, shape index: {}]
  %s1 = inlined_call_operand.hbm [shape: f32[9,32], index: 1, kind: input, shape index: {}]
  %s2 = inlined_call_operand.hbm [shape: f32[8,8], index: 2, kind: output, shape index: {}]
  %s3 = sld [smem:[#allocation0]]
  $region26: #{tpu_custom_call.1} parent=0
    _
  %s5 = ssub.s32 1, %s3
  %s6 = scalar_select 0, %s5, %s3
  $region1: #{tpu_custom_call.1} parent=0
    #allocation2 [shape = 'u8[4096]{0}', space=vmem, size = 0x1000, scoped, tag = 'input window, operand 0, single buffered']
    #allocation3 [shape = 's32[1]{0}', space=sflag, size = 0x4, scoped, tag = 'scoped memory for tpu_custom_call.1']
    #allocation4 [shape = 's32[1]{0}', space=sflag, size = 0x4, scoped, tag = 'scoped memory for tpu_custom_call.1']
    #allocation5 [shape = 'u8[8192]{0}', space=vmem, size = 0x2000, scoped, tag = 'input window, operand 1, single buffered']
    #allocation6 [shape = 's32[1]{0}', space=sflag, size = 0x4, scoped, tag = 'scoped memory for tpu_custom_call.1']
    #allocation7 [shape = 'u8[4096]{0}', space=vmem, size = 0x1000, scoped, tag = 'output window, operand 0, single buffered']
    %7 = vsyncpa [#allocation3], 0
    %8 = vsyncpa [#allocation6], 0
    %9 = vsyncpa [#allocation4], 0
    // Predicated region
    $region2: #{tpu_custom_call.1} parent=1 // pred_check
      _
    $region3: #{tpu_custom_call.1} parent=1 // pred_check_branch
      %11 = sbr.rel (0) target = $region5
    $region4: #{tpu_custom_call.1} parent=1 // pred_region
      %13 = vsyncadd [#allocation3], 0
      %s15 = sshll.u32 %s0, 4
      %s16 = int_to_ptr.hbm [resolvable:$true] %s15
      %s17 = sshll.u32 [#allocation2], 4
      %s18 = int_to_ptr.vmem [resolvable:$true] %s17
      %20 = dma.hbm_to_vmem [thread:$0]  %s16, 128, %s18, [#allocation3]
    $region5: #{tpu_custom_call.1} parent=1 // pred_fallthru
      _
    // Predicated region
    $region6: #{tpu_custom_call.1} parent=1 // pred_check
      _
    $region7: #{tpu_custom_call.1} parent=1 // pred_check_branch
      %22 = sbr.rel (0) target = $region9
    $region8: #{tpu_custom_call.1} parent=1 // pred_region
      %24 = vsyncadd [#allocation6], 0
      %s25 = sshll.u32 %s1, 4
      %s26 = int_to_ptr.hbm [resolvable:$true] %s25
      %s27 = sshll.u32 [#allocation5], 4
      %s28 = int_to_ptr.vmem [resolvable:$true] %s27
      %33 = dma.hbm_to_vmem [thread:$0]  %s26, 256, %s28, [#allocation6], 128, 128, 8
    $region9: #{tpu_custom_call.1} parent=1 // pred_fallthru
      _
    // Predicated region
    $region10: #{tpu_custom_call.1} parent=1 // pred_check
      _
    $region11: #{tpu_custom_call.1} parent=1 // pred_check_branch
      %35 = sbr.rel (0) target = $region13
    $region12: #{tpu_custom_call.1} parent=1 // pred_region
      %37 = dma.done [#allocation3], 128
    $region13: #{tpu_custom_call.1} parent=1 // pred_fallthru
      _
    // Predicated region
    $region14: #{tpu_custom_call.1} parent=1 // pred_check
      _
    $region15: #{tpu_custom_call.1} parent=1 // pred_check_branch
      %39 = sbr.rel (0) target = $region17
    $region16: #{tpu_custom_call.1} parent=1 // pred_region
      %41 = dma.done [#allocation6], 256
    $region17: #{tpu_custom_call.1} parent=1 // pred_fallthru
      _
    %v42 = vld [vmem:[#allocation2] sm:$0xff]
    %v43 = vld [vmem:[#allocation5] sm:$0xff]
    %v44 = vld [vmem:[#allocation5 + $0x8] sm:$0x1]
    %v45 = vperm.slane %v44, 0
    %vm46 = vcmask 64512
    %v48 = vsel %vm46, %v42, 0
    %50 = vmatpush.msra.mxu0 0.0
    %51 = vmatpush.msra.mxu0 0.0
    %52 = vmatpush.msra.mxu0 0.0
    %53 = vmatpush.msra.mxu0 0.0
    %54 = vmatpush.msra.mxu0 0.0
    %55 = vmatpush.msra.mxu0 0.0
    %56 = vmatpush.msra.mxu0 0.0
    %57 = vmatpush.msra.mxu0 0.0
    %58 = vmatpush.msra.mxu0 0.0
    %59 = vmatpush.msra.mxu0 0.0
    %60 = vmatpush.msra.mxu0 0.0
    %61 = vmatpush.msra.mxu0 0.0
    %62 = vmatpush.msra.mxu0 0.0
    %63 = vmatpush.msra.mxu0 0.0
    %64 = vmatpush.msra.mxu0 0.0
    %65 = vmatpush.msra.mxu0 %v43
    %66 = vmatmul.f32.gmra.mxu0 %v48
    %v67 = vpop.f32.mrf.mxu0
    %v68 = vadd.f32 %v45, %v67
    %69 = vdwg.mxu0
    %71 = vrot.lane.b32.xlu0 %v68, 112
    %v72 = vpop.permute.xlu0 %71
    %vm73 = vcmask 130048
    %v74 = vsel %vm73, %v68, 0
    %v76 = vsel %vm73, %v72, 0
    %78 = vmatpush.xpose.msra.mxu0 0.0
    %79 = vmatpush.xpose.msra.mxu0 0.0
    %80 = vmatpush.xpose.msra.mxu0 0.0
    %81 = vmatpush.xpose.msra.mxu0 0.0
    %82 = vmatpush.xpose.msra.mxu0 0.0
    %83 = vmatpush.xpose.msra.mxu0 0.0
    %84 = vmatpush.xpose.msra.mxu0 0.0
    %85 = vmatpush.xpose.msra.mxu0 0.0
    %86 = vmatpush.xpose.msra.mxu0 0.0
    %87 = vmatpush.xpose.msra.mxu0 0.0
    %88 = vmatpush.xpose.msra.mxu0 0.0
    %89 = vmatpush.xpose.msra.mxu0 0.0
    %90 = vmatpush.xpose.msra.mxu0 0.0
    %91 = vmatpush.xpose.msra.mxu0 0.0
    %92 = vmatpush.xpose.msra.mxu0 0.0
    %93 = vmatpush.xpose.msra.mxu0 %v76
    %94 = vmatmul.f32.gmra.mxu0 %v74
    %v95 = vpop.f32.mrf.mxu0
    %v96 = vadd.f32 0.0, %v95
    %97 = vdwg.mxu0
    %98 = vst.msk [vmem:[#allocation7] sm:$0xff] %vm46, %v96
    // Predicated region
    $region18: #{tpu_custom_call.1} parent=1 // pred_check
      _
    $region19: #{tpu_custom_call.1} parent=1 // pred_check_branch
      %100 = sbr.rel (0) target = $region21
    $region20: #{tpu_custom_call.1} parent=1 // pred_region
      %102 = vsyncadd [#allocation4], 0
      %s104 = sshll.u32 [#allocation7], 4
      %s105 = int_to_ptr.vmem [resolvable:$true] %s104
      %s106 = sshll.u32 %s2, 4
      %s107 = int_to_ptr.hbm [resolvable:$true] %s106
      %109 = dma.vmem_to_hbm [thread:$0]  %s105, 128, %s107, [#allocation4]
    $region21: #{tpu_custom_call.1} parent=1 // pred_fallthru
      _
    // Predicated region
    $region22: #{tpu_custom_call.1} parent=1 // pred_check
      _
    $region23: #{tpu_custom_call.1} parent=1 // pred_check_branch
      %111 = sbr.rel (0) target = $region25
    $region24: #{tpu_custom_call.1} parent=1 // pred_region
      %113 = dma.done [#allocation4], 128
    $region25: #{tpu_custom_call.1} parent=1 // pred_fallthru
      _
    %114 = vsyncpa [#allocation3], 1
    %115 = vsyncpa [#allocation6], 1
    %116 = vsyncpa [#allocation4], 1

</llo_original>
